<compile_context>
chip_gen: v5e
topology: v5e:2x2
jax: 0.10.0
libtpu: 0.0.40
codegen_flags: <defaults>
</compile_context>

<pallas_src>
import jax
import jax.numpy as jnp
from jax.experimental import pallas as pl
from jax.experimental.pallas import tpu as pltpu


def _model_kernel(x_ref, w_ref, b_ref, o_ref):
    # x_ref: (C, L) ; w_ref: (F, C) ; b_ref: (F, 1) ; o_ref: (F, L)
    x = x_ref[...]                     # (C, L)
    w = w_ref[...]                     # (F, C)
    res = b_ref[...]                   # (F, 1) -> broadcasts over L
    # VPU-unrolled contraction over the tiny C dim (no MXU, no transposes):
    #   res[f, l] = b[f] + sum_c w[f, c] * x[c, l]
    C = x.shape[0]
    for c in range(C):                 # static Python unroll (C == 2)
        res = res + w[:, c:c + 1] * x[c:c + 1, :]
    # tanh -> sigmoid chain stays in f32; cast only at the final store.
    o_ref[...] = jax.nn.sigmoid(jnp.tanh(res)).astype(o_ref.dtype)


def model_forward(x, weight, bias):
    """x: (1, C, L); weight: (F, C); bias: (F,). Returns the squeezed (F, L) output."""
    B, C, L = x.shape
    F = weight.shape[0]
    assert B == 1, "module spec fixes batch dim to 1 (it is squeezed away)"

    x2d = x.reshape(C, L)              # drop the size-1 batch dim on the host side
    b_col = bias.reshape(F, 1)         # column vector: no relayout needed in-kernel

    out = pl.pallas_call(
        _model_kernel,
        out_shape=jax.ShapeDtypeStruct((F, L), x.dtype),
        in_specs=[
            pl.BlockSpec(memory_space=pltpu.MemorySpace.VMEM),  # x  (C, L)
            pl.BlockSpec(memory_space=pltpu.MemorySpace.VMEM),  # W  (F, C)
            pl.BlockSpec(memory_space=pltpu.MemorySpace.VMEM),  # b  (F, 1)
        ],
        out_specs=pl.BlockSpec(memory_space=pltpu.MemorySpace.VMEM),
    )(x2d, weight, b_col)

    # torch .squeeze(): with B == 1 (and F, L > 1) the result is exactly (F, L).
    return out


if __name__ == "__main__":
    key = jax.random.PRNGKey(0)
    kx, kw, kb = jax.random.split(key, 3)

    # x1 = torch.randn(1, 2, 2)
    x = jax.random.normal(kx, (1, 2, 2), dtype=jnp.float32)

    # Deterministic Linear(2, 2) parameters (synthetic init).
    weight = jax.random.normal(kw, (2, 2), dtype=jnp.float32) * 0.5
    bias = jax.random.normal(kb, (2,), dtype=jnp.float32) * 0.1

    y = model_forward(x, weight, bias)
    jax.block_until_ready(y)

    # Reference check in plain JAX (same math as the PyTorch module).
    v1 = jnp.transpose(x, (0, 2, 1))
    v2 = v1 @ weight.T + bias
    v3 = jnp.tanh(v2)
    v4 = jnp.transpose(v3, (0, 2, 1))
    ref = jnp.squeeze(jax.nn.sigmoid(v4))
    assert y.shape == ref.shape == (2, 2)
    assert jnp.allclose(y, ref, atol=1e-5), (y, ref)

    print("KERNEL_OK")
</pallas_src>

<mosaic_0001>
module attributes {stable_mosaic.version = 11 : i64} {
  func.func @_model_kernel(%arg0: memref<2x2xf32, #tpu.memory_space<vmem>>, %arg1: memref<2x2xf32, #tpu.memory_space<vmem>>, %arg2: memref<2x1xf32, #tpu.memory_space<vmem>>, %arg3: memref<2x2xf32, #tpu.memory_space<vmem>>) attributes {dimension_semantics = [], scalar_prefetch = 0 : i64, scratch_operands = 0 : i64, tpu.core_type = #tpu.core_type<tc>} {
    %c0 = arith.constant 0 : index
    %c0_0 = arith.constant 0 : index
    %0 = vector.load %arg0[%c0, %c0_0] : memref<2x2xf32, #tpu.memory_space<vmem>>, vector<2x2xf32>
    %c0_1 = arith.constant 0 : index
    %c0_2 = arith.constant 0 : index
    %1 = vector.load %arg1[%c0_1, %c0_2] : memref<2x2xf32, #tpu.memory_space<vmem>>, vector<2x2xf32>
    %c0_3 = arith.constant 0 : index
    %c0_4 = arith.constant 0 : index
    %2 = vector.load %arg2[%c0_3, %c0_4] : memref<2x1xf32, #tpu.memory_space<vmem>>, vector<2x1xf32>
    %3 = vector.extract_strided_slice %1 {offsets = [0, 0], sizes = [2, 1], strides = [1, 1]} : vector<2x2xf32> to vector<2x1xf32>
    %4 = vector.extract_strided_slice %0 {offsets = [0, 0], sizes = [1, 2], strides = [1, 1]} : vector<2x2xf32> to vector<1x2xf32>
    %5 = vector.broadcast %3 : vector<2x1xf32> to vector<2x2xf32>
    %6 = vector.broadcast %4 : vector<1x2xf32> to vector<2x2xf32>
    %7 = arith.mulf %5, %6 : vector<2x2xf32>
    %8 = vector.broadcast %2 : vector<2x1xf32> to vector<2x2xf32>
    %9 = arith.addf %8, %7 : vector<2x2xf32>
    %10 = vector.extract_strided_slice %1 {offsets = [0, 1], sizes = [2, 1], strides = [1, 1]} : vector<2x2xf32> to vector<2x1xf32>
    %11 = vector.extract_strided_slice %0 {offsets = [1, 0], sizes = [1, 2], strides = [1, 1]} : vector<2x2xf32> to vector<1x2xf32>
    %12 = vector.broadcast %10 : vector<2x1xf32> to vector<2x2xf32>
    %13 = vector.broadcast %11 : vector<1x2xf32> to vector<2x2xf32>
    %14 = arith.mulf %12, %13 : vector<2x2xf32>
    %15 = arith.addf %9, %14 : vector<2x2xf32>
    %16 = math.tanh %15 : vector<2x2xf32>
    %17 = arith.negf %16 : vector<2x2xf32>
    %18 = math.exp %17 : vector<2x2xf32>
    %cst = arith.constant 1.000000e+00 : f32
    %19 = vector.broadcast %cst : f32 to vector<2x2xf32>
    %20 = arith.addf %19, %18 : vector<2x2xf32>
    %21 = arith.divf %19, %20 : vector<2x2xf32>
    %c0_5 = arith.constant 0 : index
    %c0_6 = arith.constant 0 : index
    %22 = vector.load %arg3[%c0_5, %c0_6] : memref<2x2xf32, #tpu.memory_space<vmem>>, vector<2x2xf32>
    tpu.vector_store %arg3[%c0_5, %c0_6], %21 {strides = array<i32>} : memref<2x2xf32, #tpu.memory_space<vmem>>, vector<2x2xf32>,
    return
  }
}

</mosaic_0001>

<llo_original>
// kernel: tpu_custom_call.1
$region0: #{tpu_custom_call.1}
  #allocation0 [shape = 'u32[]', space=smem, size = 0x4, offset = 0x4, fixed_abs, tag = 'smem constant byte address 0x4 - core index']
  #allocation1 [shape = 'u32[72,128]{1,0:T(1,128)}', space=vmem, size = 0x9000, scoped, tag = 'internal scratch']
  %s0 = inlined_call_operand.vmem [shape: f32[2,2], index: 0, kind: input, shape index: {}]
  %s1 = inlined_call_operand.hbm [shape: f32[2,2], index: 1, kind: input, shape index: {}]
  %s2 = inlined_call_operand.vmem [shape: f32[2,1], index: 2, kind: input, shape index: {}]
  %s3 = inlined_call_operand.hbm [shape: f32[2,2], index: 3, kind: output, shape index: {}]
  %s4 = sld [smem:[#allocation0]]
  $region26: #{tpu_custom_call.1} parent=0
    _
  %s6 = ssub.s32 1, %s4
  %s7 = scalar_select 0, %s6, %s4
  $region1: #{tpu_custom_call.1} parent=0
    #allocation2 [shape = 'u8[1024]{0}', space=vmem, size = 0x400, scoped, tag = 'input window, operand 1, single buffered']
    #allocation3 [shape = 's32[1]{0}', space=sflag, size = 0x4, scoped, tag = 'scoped memory for tpu_custom_call.1']
    #allocation4 [shape = 's32[1]{0}', space=sflag, size = 0x4, scoped, tag = 'scoped memory for tpu_custom_call.1']
    #allocation5 [shape = 'u8[1024]{0}', space=vmem, size = 0x400, scoped, tag = 'output window, operand 0, single buffered']
    %8 = vsyncpa [#allocation3], 0
    %9 = vsyncpa [#allocation4], 0
    // Predicated region
    $region2: #{tpu_custom_call.1} parent=1 // pred_check
      _
    $region3: #{tpu_custom_call.1} parent=1 // pred_check_branch
      %11 = sbr.rel (0) target = $region5
    $region4: #{tpu_custom_call.1} parent=1 // pred_region
      _
    $region5: #{tpu_custom_call.1} parent=1 // pred_fallthru
      _
    // Predicated region
    $region6: #{tpu_custom_call.1} parent=1 // pred_check
      _
    $region7: #{tpu_custom_call.1} parent=1 // pred_check_branch
      %13 = sbr.rel (0) target = $region9
    $region8: #{tpu_custom_call.1} parent=1 // pred_region
      %15 = vsyncadd [#allocation3], 0
      %s17 = sshll.u32 %s1, 4
      %s18 = int_to_ptr.hbm [resolvable:$true] %s17
      %s19 = sshll.u32 [#allocation2], 4
      %s20 = int_to_ptr.vmem [resolvable:$true] %s19
      %22 = dma.hbm_to_vmem [thread:$0]  %s18, 32, %s20, [#allocation3]
    $region9: #{tpu_custom_call.1} parent=1 // pred_fallthru
      _
    // Predicated region
    $region10: #{tpu_custom_call.1} parent=1 // pred_check
      _
    $region11: #{tpu_custom_call.1} parent=1 // pred_check_branch
      %24 = sbr.rel (0) target = $region13
    $region12: #{tpu_custom_call.1} parent=1 // pred_region
      _
    $region13: #{tpu_custom_call.1} parent=1 // pred_fallthru
      _
    // Predicated region
    $region14: #{tpu_custom_call.1} parent=1 // pred_check
      _
    $region15: #{tpu_custom_call.1} parent=1 // pred_check_branch
      %26 = sbr.rel (0) target = $region17
    $region16: #{tpu_custom_call.1} parent=1 // pred_region
      %28 = dma.done [#allocation3], 32
    $region17: #{tpu_custom_call.1} parent=1 // pred_fallthru
      _
    %v29 = vld [vmem:[%s0] sm:$0x3]
    %v30 = vld [vmem:[#allocation2] sm:$0x3]
    %v31 = vld [vmem:[%s2] sm:$0x3]
    %33 = vset.pattern.permute.xlu0 0
    %34 = vperm.xlu0 %33, %v30
    %v35 = vpop.permute.xlu0 %34
    %v37 = vperm.slane %v29, 0
    %v38 = vmul.f32 %v35, %v37
    %40 = vset.pattern.permute.xlu0 0
    %41 = vperm.xlu0 %40, %v31
    %v42 = vpop.permute.xlu0 %41
    %v44 = vadd.f32 %v42, %v38
    %45 = vset.pattern.permute.xlu0 1
    %46 = vperm.xlu0 %45, %v30
    %v47 = vpop.permute.xlu0 %46
    %v49 = vperm.slane %v29, 1
    %v50 = vmul.f32 %v47, %v49
    %v51 = vadd.f32 %v44, %v50
    %v52 = vtanh.pop %v51
    %v53 = vxor.u32 %v52, 2147483648
    %v54 = vmul.f32 %v53, 1.442695
    %v55 = vpow.pop %v54
    %v56 = vadd.f32 %v55, 1.0
    %v57 = vrcp.pop %v56
    %v58 = vmul.f32 %v56, %v57
    %v59 = vsub.f32 1.0, %v58
    %v60 = vmul.f32 %v57, %v59
    %v61 = vadd.f32 %v57, %v60
    %vm62 = vweird.f32 %v56
    %vm63 = vweird.f32 %v57
    %vm64 = vmor %vm62, %vm63
    %v65 = vsel %vm64, %v57, %v61
    %v66 = vand.u32 2147483647, %v56
    %vm67 = vcmp.eq.f32.partialorder %v66, 8.507059e+37
    %v68 = vand.u32 %v56, 2147483648
    %v69 = vor.u32 1.1754944e-38, %v68
    %v70 = vsel %vm67, %v69, %v65
    %v71 = vmul.f32 1.0, %v70
    %vm72 = vcmask 9216
    %73 = vst.msk [vmem:[#allocation5] sm:$0x3] %vm72, %v71
    // Predicated region
    $region18: #{tpu_custom_call.1} parent=1 // pred_check
      _
    $region19: #{tpu_custom_call.1} parent=1 // pred_check_branch
      %75 = sbr.rel (0) target = $region21
    $region20: #{tpu_custom_call.1} parent=1 // pred_region
      %77 = vsyncadd [#allocation4], 0
      %s79 = sshll.u32 [#allocation5], 4
      %s80 = int_to_ptr.vmem [resolvable:$true] %s79
      %s81 = sshll.u32 %s3, 4
      %s82 = int_to_ptr.hbm [resolvable:$true] %s81
      %84 = dma.vmem_to_hbm [thread:$0]  %s80, 32, %s82, [#allocation4]
    $region21: #{tpu_custom_call.1} parent=1 // pred_fallthru
      _
    // Predicated region
    $region22: #{tpu_custom_call.1} parent=1 // pred_check
      _
    $region23: #{tpu_custom_call.1} parent=1 // pred_check_branch
      %86 = sbr.rel (0) target = $region25
    $region24: #{tpu_custom_call.1} parent=1 // pred_region
      %88 = dma.done [#allocation4], 32
    $region25: #{tpu_custom_call.1} parent=1 // pred_fallthru
      _
    %89 = vsyncpa [#allocation3], 1
    %90 = vsyncpa [#allocation4], 1

</llo_original>
